<compile_context>
chip_gen: v5e
topology: v5e:2x2
jax: 0.10.0
libtpu: 0.0.40
codegen_flags: <defaults>
</compile_context>

<pallas_src>
import functools

import jax
import jax.numpy as jnp
from jax.experimental import pallas as pl
from jax.experimental.pallas import tpu as pltpu


def _cdiv(a, b):
    return -(-a // b)


def _round_up(a, b):
    return _cdiv(a, b) * b


def _vmem_limit_bytes():
    """Generation-aware VMEM limit: ~7/8 of physical capacity, conservative fallback."""
    cap = 0
    try:
        cap = int(getattr(pltpu.get_tpu_info(), "vmem_capacity_bytes", 0) or 0)
    except Exception:
        cap = 0
    if cap <= 0:
        cap = 64 * 1024 * 1024          # v7x per-TC capacity -> 56 MiB limit, safe everywhere
    return (cap * 7) // 8


def _pick_tile(out_len, B, C, O, in_itemsize, vmem_limit, tile_l):
    """128-aligned length tile that fits comfortably inside the VMEM budget."""
    tl = _round_up(max(int(tile_l), 128), 128)
    tl = min(tl, _round_up(max(out_len, 1), 128))
    tl = max(tl, 128)

    budget = int(vmem_limit * 0.6)      # headroom for weights, vreg spills, temporaries

    def vmem_need(t):
        main = 2 * C * t * in_itemsize          # double-buffered main input tile
        halos = 2 * 2 * C * 128 * in_itemsize   # two halo streams, double-buffered
        outb = 2 * O * t * 4                    # double-buffered output tile
        scratch = C * (t + 256) * 4             # f32 window scratch
        temps = 2 * C * (t + 256) * 4           # rolled copies / masks headroom
        return main + halos + outb + scratch + temps

    while tl > 128 and vmem_need(tl) > budget:
        tl -= 128

    # v7x has 2 TensorCores: with B == 1, make sure the length axis exposes >= 2 steps.
    if B == 1 and out_len > 128 and _cdiv(out_len, tl) < 2:
        tl = max(128, _round_up(_cdiv(out_len, 2), 128))
    return tl


def _dwpw_kernel(xm_ref, xl_ref, xr_ref, wd_ref, wp_ref, bp_ref, out_ref, w_ref,
                 *, k, p, tl, L):
    """Depthwise (k taps) + pointwise 1x1 conv for one (batch, length-tile) block.

    xm_ref: (1, C, tl)   main input tile, input columns [t*tl, t*tl + tl)
    xl_ref: (1, C, 128)  128-block immediately left of the main tile (clamped at edge)
    xr_ref: (1, C, 128)  128-block immediately right of the main tile (clamped at edge)
    wd_ref: (C, k)       depthwise weights (PyTorch (C,1,k) squeezed), f32
    wp_ref: (O, C)       pointwise weights (PyTorch (O,C,1) squeezed), bf16 by default
    bp_ref: (O, 1)       effective bias  bp + wp @ bd  (f32, folded on host)
    out_ref:(1, O, tl)   output tile, output columns [t*tl, t*tl + tl)
    w_ref:  (C, tl+256)  f32 VMEM scratch holding the lane-aligned conv window
    """
    t = pl.program_id(1)
    c = xm_ref.shape[1]
    tw = tl + 256

    # Assemble the window covering input columns [t*tl - 128, t*tl + tl + 128).
    # Interior tiles pay only these three plain stores; the Conv1d zero padding and
    # the garbage tails of partial/clamped blocks are realised under pl.when so the
    # iota/compare/select work only runs on tiles that actually touch a boundary.
    w_ref[:, :128] = xl_ref[0].astype(jnp.float32)
    w_ref[:, 128:128 + tl] = xm_ref[0].astype(jnp.float32)
    w_ref[:, 128 + tl:] = xr_ref[0].astype(jnp.float32)

    @pl.when(t == 0)
    def _():
        # Left halo of the first tile is entirely Conv1d zero padding (columns < 0).
        w_ref[:, :128] = jnp.zeros((c, 128), jnp.float32)

    @pl.when((t + 1) * tl + 128 > L)
    def _():
        # Right halo touches (or lies past) the end of the input: zero columns >= L.
        col = jax.lax.broadcasted_iota(jnp.int32, (c, 128), 1)
        w_ref[:, 128 + tl:] = jnp.where(col < L - (t + 1) * tl,
                                        xr_ref[0].astype(jnp.float32), 0.0)

    @pl.when((t + 1) * tl > L)
    def _():
        # Last / clamped main tile: zero columns >= L (padding + partial-block garbage).
        col = jax.lax.broadcasted_iota(jnp.int32, (c, tl), 1)
        w_ref[:, 128:128 + tl] = jnp.where(col < L - t * tl,
                                           xm_ref[0].astype(jnp.float32), 0.0)

    w = w_ref[...]                                              # (C, tw) f32

    # Depthwise cross-correlation: dw[c, tau] = sum_j wd[c, j] * x[c, t*tl + tau + j - p]
    wd = wd_ref[...].astype(jnp.float32)                        # (C, k), resident
    acc = None
    for j in range(k):
        d = j - p                                               # tap offset in [-p, k-1-p]
        if d == 0:
            # Lane-aligned static slice (128 and tl are multiples of 128): no XLU roll.
            r = w[:, 128:128 + tl]
        else:
            # r[:, tau] == w[:, tau + 128 + d] for tau < tl (rotation never wraps there).
            r = pltpu.roll(w, tw - (128 + d), 1)[:, :tl]
        term = r * wd[:, j:j + 1]
        acc = term if acc is None else acc + term               # (C, tl) f32

    # Pointwise 1x1 conv == (O, C) @ (C, tl) matmul on the MXU; operands in wp's dtype
    # (bf16 by default), f32 accumulation.  Depthwise bias already folded into bp_ref.
    y = jnp.dot(wp_ref[...], acc.astype(wp_ref.dtype),
                preferred_element_type=jnp.float32)
    y = y + bp_ref[...]
    out_ref[0, :, :] = y.astype(out_ref.dtype)


def _pw_kernel(x_ref, wp_ref, bp_ref, out_ref):
    """k == 1 path: depthwise is nn.Identity(), only the pointwise matmul.

    No tail mask: the pointwise conv is column-local and Pallas masks the partial
    store of the last tile, so garbage tail columns never reach HBM.
    """
    y = jnp.dot(wp_ref[...], x_ref[0].astype(wp_ref.dtype),
                preferred_element_type=jnp.float32)
    y = y + bp_ref[...]
    out_ref[0, :, :] = y.astype(out_ref.dtype)


def depth_pointwise_conv1d(x, params, k, *, tile_l=1024, use_bf16_matmul=True):
    """x: (B, C_in, L).  Returns (B, C_out, L_out), L_out = L + 2*(k//2) - k + 1."""
    B, C, L = x.shape
    wp = params["pw_weight"].astype(jnp.float32)   # (O, C)
    bp = params["pw_bias"].astype(jnp.float32)     # (O, 1)
    O = wp.shape[0]

    p = k // 2
    out_len = L + 2 * p - k + 1                    # PyTorch Conv1d output length (== L for odd k)

    vmem_limit = _vmem_limit_bytes()
    tl = _pick_tile(out_len, B, C, O, x.dtype.itemsize, vmem_limit, tile_l)
    n_lt = _cdiv(out_len, tl)                      # number of length tiles (last may be partial)

    mm_dtype = jnp.bfloat16 if use_bf16_matmul else jnp.float32
    wp_mm = wp.astype(mm_dtype)                    # bf16 MXU operand + half the resident weight VMEM

    cparams = pltpu.CompilerParams(
        dimension_semantics=("parallel", "parallel"),
        vmem_limit_bytes=int(vmem_limit),
    )

    if k == 1:
        return pl.pallas_call(
            _pw_kernel,
            out_shape=jax.ShapeDtypeStruct((B, O, out_len), x.dtype),
            grid=(B, n_lt),
            in_specs=[
                pl.BlockSpec((1, C, tl), lambda b, t: (b, 0, t)),
                pl.BlockSpec((O, C), lambda b, t: (0, 0)),   # constant index maps ->
                pl.BlockSpec((O, 1), lambda b, t: (0, 0)),   #   weights DMA'd once
            ],
            out_specs=pl.BlockSpec((1, O, tl), lambda b, t: (b, 0, t)),
            compiler_params=cparams,
        )(x, wp_mm, bp)

    wd = params["dw_weight"].astype(jnp.float32)   # (C, k)
    bd = params["dw_bias"].astype(jnp.float32)     # (C, 1)
    # Fold the depthwise bias into the pointwise bias (exact f32 on the host):
    #   wp @ (dw + bd) + bp == wp @ dw + (bp + wp @ bd)
    bp_eff = bp + wp @ bd                          # (O, 1)

    n128 = tl // 128                               # 128-blocks per length tile
    nb_main = _cdiv(L, tl)                         # number of main-tile blocks in x
    nb_128 = _cdiv(L, 128)                         # number of 128-blocks in x

    # Halo without jnp.pad: fetch the 128-wide blocks immediately left/right of the
    # main tile (indices clamped at the array edges).  Anything outside the intended
    # [t*tl-128, t*tl+tl+128) / valid [0, L) range is zeroed inside the kernel.
    xm_spec = pl.BlockSpec((1, C, tl),
                           lambda b, t: (b, 0, jnp.minimum(t, nb_main - 1)))
    xl_spec = pl.BlockSpec((1, C, 128),
                           lambda b, t: (b, 0, jnp.maximum(t * n128 - 1, 0)))
    xr_spec = pl.BlockSpec((1, C, 128),
                           lambda b, t: (b, 0, jnp.minimum((t + 1) * n128, nb_128 - 1)))

    kernel = functools.partial(_dwpw_kernel, k=k, p=p, tl=tl, L=L)
    # TODO(synk): on v7x, single-buffer the constant-index weight specs
    # (pipeline_mode=pl.Buffered(1)) once verified supported, to reclaim more VMEM.
    return pl.pallas_call(
        kernel,
        out_shape=jax.ShapeDtypeStruct((B, O, out_len), x.dtype),
        grid=(B, n_lt),
        in_specs=[
            xm_spec, xl_spec, xr_spec,
            pl.BlockSpec((C, k), lambda b, t: (0, 0)),       # constant index maps ->
            pl.BlockSpec((O, C), lambda b, t: (0, 0)),       #   weights DMA'd once,
            pl.BlockSpec((O, 1), lambda b, t: (0, 0)),       #   resident across steps
        ],
        out_specs=pl.BlockSpec((1, O, tl), lambda b, t: (b, 0, t)),
        scratch_shapes=[pltpu.VMEM((C, tl + 256), jnp.float32)],
        compiler_params=cparams,
    )(x, x, x, wd, wp_mm, bp_eff)


def init_params(key, in_ch, out_ch, k):
    """Deterministic parameter init matching the PyTorch module's shapes."""
    k1, k2, k3, k4 = jax.random.split(key, 4)
    params = {}
    if k != 1:
        # nn.Conv1d(in_ch, in_ch, k, groups=in_ch): weight (in_ch, 1, k) -> (in_ch, k)
        params["dw_weight"] = jax.random.normal(k1, (in_ch, k), jnp.float32) * 0.1
        params["dw_bias"] = jax.random.normal(k2, (in_ch, 1), jnp.float32) * 0.1
    # nn.Conv1d(in_ch, out_ch, 1): weight (out_ch, in_ch, 1) -> (out_ch, in_ch)
    params["pw_weight"] = jax.random.normal(k3, (out_ch, in_ch), jnp.float32) * 0.1
    params["pw_bias"] = jax.random.normal(k4, (out_ch, 1), jnp.float32) * 0.1
    return params


def _depthwise_f32(x, params, k):
    B, C, L = x.shape
    p = k // 2
    out_len = L + 2 * p - k + 1
    xp = jnp.pad(x.astype(jnp.float32), ((0, 0), (0, 0), (p, p)))
    dw = jnp.zeros((B, C, out_len), jnp.float32)
    for j in range(k):
        dw = dw + xp[:, :, j:j + out_len] * params["dw_weight"][None, :, j:j + 1]
    return dw


def reference_exact(x, params, k):
    """Pure-JAX, exact-f32 reference of the PyTorch forward pass."""
    if k == 1:
        dw = x.astype(jnp.float32)
    else:
        dw = _depthwise_f32(x, params, k) + params["dw_bias"][None, :, :]
    y = jnp.sum(params["pw_weight"][None, :, :, None] * dw[:, None, :, :], axis=2)
    return (y + params["pw_bias"][None, :, :]).astype(x.dtype)


def reference_kernel_math(x, params, k, use_bf16=True):
    """Reference mimicking the kernel's math (bf16 MXU operands, folded bias)."""
    wp = params["pw_weight"].astype(jnp.float32)
    bp = params["pw_bias"].astype(jnp.float32)
    mm = jnp.bfloat16 if use_bf16 else jnp.float32
    if k == 1:
        dw = x.astype(jnp.float32)
        bp_eff = bp
    else:
        dw = _depthwise_f32(x, params, k)
        bp_eff = bp + wp @ params["dw_bias"].astype(jnp.float32)
    y = jnp.einsum("oc,bcl->bol",
                   wp.astype(mm).astype(jnp.float32),
                   dw.astype(mm).astype(jnp.float32))
    return (y + bp_eff[None]).astype(x.dtype)


if __name__ == "__main__":
    # Primary small case first (B=2, C=4, O=8, L=16, k=3), then extra shapes that
    # exercise the k==1 path, multi-tile halos, partial edge tiles and even k.
    cases = [
        dict(B=2, C=4, O=8, L=16, k=3, tile_l=1024),
        dict(B=2, C=4, O=8, L=16, k=1, tile_l=1024),
        dict(B=2, C=8, O=16, L=300, k=5, tile_l=128),
        dict(B=1, C=8, O=8, L=256, k=4, tile_l=128),
    ]
    root = jax.random.PRNGKey(0)
    for i, c in enumerate(cases):
        key = jax.random.fold_in(root, i)
        kx, kp = jax.random.split(key)
        x = jax.random.normal(kx, (c["B"], c["C"], c["L"]), jnp.float32)
        params = init_params(kp, c["C"], c["O"], c["k"])

        out = depth_pointwise_conv1d(x, params, c["k"], tile_l=c["tile_l"])
        out = jax.block_until_ready(out)

        p = c["k"] // 2
        out_len = c["L"] + 2 * p - c["k"] + 1
        assert out.shape == (c["B"], c["O"], out_len), (out.shape, c)

        # Tight check vs a reference using the kernel's own arithmetic (bf16 MXU
        # operands, f32 accumulation, folded bias): catches structural/halo/tap errors.
        ref_k = reference_kernel_math(x, params, c["k"], use_bf16=True)
        err_k = float(jnp.max(jnp.abs(out - ref_k)))
        assert err_k < 2e-3, ("kernel-math mismatch", err_k, c)

        # Loose sanity check vs the exact-f32 PyTorch-semantics reference; slack
        # absorbs the bf16 MXU operand rounding (default on).
        ref_f = reference_exact(x, params, c["k"])
        err_f = float(jnp.max(jnp.abs(out - ref_f)))
        assert err_f < 2e-2, ("f32 reference mismatch", err_f, c)

    print("KERNEL_OK")
</pallas_src>

<mosaic_0001>
module attributes {stable_mosaic.version = 11 : i64} {
  func.func @_dwpw_kernel(%arg0: i32, %arg1: i32, %arg2: memref<1x4x128xf32, #tpu.memory_space<vmem>>, %arg3: memref<1x4x128xf32, #tpu.memory_space<vmem>>, %arg4: memref<1x4x128xf32, #tpu.memory_space<vmem>>, %arg5: memref<4x3xf32, #tpu.memory_space<vmem>>, %arg6: memref<8x4xbf16, #tpu.memory_space<vmem>>, %arg7: memref<8x1xf32, #tpu.memory_space<vmem>>, %arg8: memref<1x8x128xf32, #tpu.memory_space<vmem>>, %arg9: memref<4x384xf32, #tpu.memory_space<vmem>>) attributes {dimension_semantics = [#tpu.dimension_semantics<parallel>, #tpu.dimension_semantics<parallel>], iteration_bounds = array<i64: 2, 1>, scalar_prefetch = 0 : i64, scratch_operands = 1 : i64, tpu.core_type = #tpu.core_type<tc>, window_params = [{transform_indices = @transform_0, window_bounds = array<i64: 1, 4, 128>}, {transform_indices = @transform_1, window_bounds = array<i64: 1, 4, 128>}, {transform_indices = @transform_2, window_bounds = array<i64: 1, 4, 128>}, {pipeline_mode = #tpu.pipeline_mode<synchronous>, transform_indices = @transform_3, window_bounds = array<i64: 4, 3>}, {pipeline_mode = #tpu.pipeline_mode<synchronous>, transform_indices = @transform_4, window_bounds = array<i64: 8, 4>}, {pipeline_mode = #tpu.pipeline_mode<synchronous>, transform_indices = @transform_5, window_bounds = array<i64: 8, 1>}, {transform_indices = @transform_6, window_bounds = array<i64: 1, 8, 128>}]} {
    %c0 = arith.constant 0 : index
    %c0_0 = arith.constant 0 : index
    %c0_1 = arith.constant 0 : index
    %0 = vector.load %arg3[%c0, %c0_0, %c0_1] : memref<1x4x128xf32, #tpu.memory_space<vmem>>, vector<1x4x128xf32>
    %1 = vector.shape_cast %0 : vector<1x4x128xf32> to vector<4x128xf32>
    %c0_2 = arith.constant 0 : index
    %c0_3 = arith.constant 0 : index
    %2 = vector.load %arg9[%c0_2, %c0_3] : memref<4x384xf32, #tpu.memory_space<vmem>>, vector<4x128xf32>
    tpu.vector_store %arg9[%c0_2, %c0_3], %1 {strides = array<i32>} : memref<4x384xf32, #tpu.memory_space<vmem>>, vector<4x128xf32>,
    %c0_4 = arith.constant 0 : index
    %c0_5 = arith.constant 0 : index
    %c0_6 = arith.constant 0 : index
    %3 = vector.load %arg2[%c0_4, %c0_5, %c0_6] : memref<1x4x128xf32, #tpu.memory_space<vmem>>, vector<1x4x128xf32>
    %4 = vector.shape_cast %3 : vector<1x4x128xf32> to vector<4x128xf32>
    %c0_7 = arith.constant 0 : index
    %c128 = arith.constant 128 : index
    %5 = vector.load %arg9[%c0_7, %c128] : memref<4x384xf32, #tpu.memory_space<vmem>>, vector<4x128xf32>
    tpu.vector_store %arg9[%c0_7, %c128], %4 {strides = array<i32>} : memref<4x384xf32, #tpu.memory_space<vmem>>, vector<4x128xf32>,
    %c0_8 = arith.constant 0 : index
    %c0_9 = arith.constant 0 : index
    %c0_10 = arith.constant 0 : index
    %6 = vector.load %arg4[%c0_8, %c0_9, %c0_10] : memref<1x4x128xf32, #tpu.memory_space<vmem>>, vector<1x4x128xf32>
    %7 = vector.shape_cast %6 : vector<1x4x128xf32> to vector<4x128xf32>
    %c0_11 = arith.constant 0 : index
    %c256 = arith.constant 256 : index
    %8 = vector.load %arg9[%c0_11, %c256] : memref<4x384xf32, #tpu.memory_space<vmem>>, vector<4x128xf32>
    tpu.vector_store %arg9[%c0_11, %c256], %7 {strides = array<i32>} : memref<4x384xf32, #tpu.memory_space<vmem>>, vector<4x128xf32>,
    %c0_i32 = arith.constant 0 : i32
    %9 = arith.cmpi eq, %arg1, %c0_i32 : i32
    %10 = arith.extui %9 : i1 to i32
    %c0_i32_12 = arith.constant 0 : i32
    %11 = arith.cmpi ne, %10, %c0_i32_12 : i32
    scf.if %11 {
      %cst_30 = arith.constant 0.000000e+00 : f32
      %50 = vector.broadcast %cst_30 : f32 to vector<4x128xf32>
      %c0_31 = arith.constant 0 : index
      %c0_32 = arith.constant 0 : index
      %51 = vector.load %arg9[%c0_31, %c0_32] : memref<4x384xf32, #tpu.memory_space<vmem>>, vector<4x128xf32>
      tpu.vector_store %arg9[%c0_31, %c0_32], %50 {strides = array<i32>} : memref<4x384xf32, #tpu.memory_space<vmem>>, vector<4x128xf32>,
    } else {
    }
    %c1_i32 = arith.constant 1 : i32
    %12 = arith.addi %arg1, %c1_i32 : i32
    %c128_i32 = arith.constant 128 : i32
    %13 = arith.muli %12, %c128_i32 : i32
    %c128_i32_13 = arith.constant 128 : i32
    %14 = arith.addi %13, %c128_i32_13 : i32
    %c16_i32 = arith.constant 16 : i32
    %15 = arith.cmpi sgt, %14, %c16_i32 : i32
    %16 = arith.extui %15 : i1 to i32
    %c0_i32_14 = arith.constant 0 : i32
    %17 = arith.cmpi ne, %16, %c0_i32_14 : i32
    scf.if %17 {
      %50 = tpu.iota {dimensions = array<i32: 1>} : vector<4x128xi32>
      %c1_i32_30 = arith.constant 1 : i32
      %51 = arith.addi %arg1, %c1_i32_30 : i32
      %c128_i32_31 = arith.constant 128 : i32
      %52 = arith.muli %51, %c128_i32_31 : i32
      %c16_i32_32 = arith.constant 16 : i32
      %53 = arith.subi %c16_i32_32, %52 : i32
      %54 = vector.broadcast %53 : i32 to vector<4x128xi32>
      %55 = arith.cmpi slt, %50, %54 : vector<4x128xi32>
      %c0_33 = arith.constant 0 : index
      %c0_34 = arith.constant 0 : index
      %c0_35 = arith.constant 0 : index
      %56 = vector.load %arg4[%c0_33, %c0_34, %c0_35] : memref<1x4x128xf32, #tpu.memory_space<vmem>>, vector<1x4x128xf32>
      %57 = vector.shape_cast %56 : vector<1x4x128xf32> to vector<4x128xf32>
      %cst_36 = arith.constant 0.000000e+00 : f32
      %58 = vector.broadcast %cst_36 : f32 to vector<4x128xf32>
      %59 = arith.select %55, %57, %58 : vector<4x128xi1>, vector<4x128xf32>
      %c0_37 = arith.constant 0 : index
      %c256_38 = arith.constant 256 : index
      %60 = vector.load %arg9[%c0_37, %c256_38] : memref<4x384xf32, #tpu.memory_space<vmem>>, vector<4x128xf32>
      tpu.vector_store %arg9[%c0_37, %c256_38], %59 {strides = array<i32>} : memref<4x384xf32, #tpu.memory_space<vmem>>, vector<4x128xf32>,
    } else {
    }
    %c1_i32_15 = arith.constant 1 : i32
    %18 = arith.addi %arg1, %c1_i32_15 : i32
    %c128_i32_16 = arith.constant 128 : i32
    %19 = arith.muli %18, %c128_i32_16 : i32
    %c16_i32_17 = arith.constant 16 : i32
    %20 = arith.cmpi sgt, %19, %c16_i32_17 : i32
    %21 = arith.extui %20 : i1 to i32
    %c0_i32_18 = arith.constant 0 : i32
    %22 = arith.cmpi ne, %21, %c0_i32_18 : i32
    scf.if %22 {
      %50 = tpu.iota {dimensions = array<i32: 1>} : vector<4x128xi32>
      %c128_i32_30 = arith.constant 128 : i32
      %51 = arith.muli %arg1, %c128_i32_30 : i32
      %c16_i32_31 = arith.constant 16 : i32
      %52 = arith.subi %c16_i32_31, %51 : i32
      %53 = vector.broadcast %52 : i32 to vector<4x128xi32>
      %54 = arith.cmpi slt, %50, %53 : vector<4x128xi32>
      %c0_32 = arith.constant 0 : index
      %c0_33 = arith.constant 0 : index
      %c0_34 = arith.constant 0 : index
      %55 = vector.load %arg2[%c0_32, %c0_33, %c0_34] : memref<1x4x128xf32, #tpu.memory_space<vmem>>, vector<1x4x128xf32>
      %56 = vector.shape_cast %55 : vector<1x4x128xf32> to vector<4x128xf32>
      %cst_35 = arith.constant 0.000000e+00 : f32
      %57 = vector.broadcast %cst_35 : f32 to vector<4x128xf32>
      %58 = arith.select %54, %56, %57 : vector<4x128xi1>, vector<4x128xf32>
      %c0_36 = arith.constant 0 : index
      %c128_37 = arith.constant 128 : index
      %59 = vector.load %arg9[%c0_36, %c128_37] : memref<4x384xf32, #tpu.memory_space<vmem>>, vector<4x128xf32>
      tpu.vector_store %arg9[%c0_36, %c128_37], %58 {strides = array<i32>} : memref<4x384xf32, #tpu.memory_space<vmem>>, vector<4x128xf32>,
    } else {
    }
    %c0_19 = arith.constant 0 : index
    %c0_20 = arith.constant 0 : index
    %23 = vector.load %arg9[%c0_19, %c0_20] : memref<4x384xf32, #tpu.memory_space<vmem>>, vector<4x384xf32>
    %c0_21 = arith.constant 0 : index
    %c0_22 = arith.constant 0 : index
    %24 = vector.load %arg5[%c0_21, %c0_22] : memref<4x3xf32, #tpu.memory_space<vmem>>, vector<4x3xf32>
    %c257_i32 = arith.constant 257 : i32
    %25 = tpu.dynamic_rotate %23 by %c257_i32 dim 1 : vector<4x384xf32>, i32 -> vector<4x384xf32>
    %26 = vector.extract_strided_slice %25 {offsets = [0, 0], sizes = [4, 128], strides = [1, 1]} : vector<4x384xf32> to vector<4x128xf32>
    %27 = vector.extract_strided_slice %24 {offsets = [0, 0], sizes = [4, 1], strides = [1, 1]} : vector<4x3xf32> to vector<4x1xf32>
    %28 = vector.broadcast %27 : vector<4x1xf32> to vector<4x128xf32>
    %29 = arith.mulf %26, %28 : vector<4x128xf32>
    %30 = vector.extract_strided_slice %23 {offsets = [0, 128], sizes = [4, 128], strides = [1, 1]} : vector<4x384xf32> to vector<4x128xf32>
    %31 = vector.extract_strided_slice %24 {offsets = [0, 1], sizes = [4, 1], strides = [1, 1]} : vector<4x3xf32> to vector<4x1xf32>
    %32 = vector.broadcast %31 : vector<4x1xf32> to vector<4x128xf32>
    %33 = arith.mulf %30, %32 : vector<4x128xf32>
    %34 = arith.addf %29, %33 : vector<4x128xf32>
    %c255_i32 = arith.constant 255 : i32
    %35 = tpu.dynamic_rotate %23 by %c255_i32 dim 1 : vector<4x384xf32>, i32 -> vector<4x384xf32>
    %36 = vector.extract_strided_slice %35 {offsets = [0, 0], sizes = [4, 128], strides = [1, 1]} : vector<4x384xf32> to vector<4x128xf32>
    %37 = vector.extract_strided_slice %24 {offsets = [0, 2], sizes = [4, 1], strides = [1, 1]} : vector<4x3xf32> to vector<4x1xf32>
    %38 = vector.broadcast %37 : vector<4x1xf32> to vector<4x128xf32>
    %39 = arith.mulf %36, %38 : vector<4x128xf32>
    %40 = arith.addf %34, %39 : vector<4x128xf32>
    %c0_23 = arith.constant 0 : index
    %c0_24 = arith.constant 0 : index
    %41 = vector.load %arg6[%c0_23, %c0_24] : memref<8x4xbf16, #tpu.memory_space<vmem>>, vector<8x4xbf16>
    %42 = arith.truncf %40 : vector<4x128xf32> to vector<4x128xbf16>
    %cst = arith.constant dense<0.000000e+00> : vector<8x128xf32>
    %43 = tpu.matmul %41, %42, %cst {dimension_numbers = #tpu.dot_dimension_numbers<[1], [0], [0], [1], [0, 0, 1, 1], [], []>} : vector<8x4xbf16>, vector<4x128xbf16>, vector<8x128xf32> -> vector<8x128xf32>
    %c0_25 = arith.constant 0 : index
    %c0_26 = arith.constant 0 : index
    %44 = vector.load %arg7[%c0_25, %c0_26] : memref<8x1xf32, #tpu.memory_space<vmem>>, vector<8x1xf32>
    %45 = vector.broadcast %44 : vector<8x1xf32> to vector<8x128xf32>
    %46 = arith.addf %43, %45 : vector<8x128xf32>
    %c0_27 = arith.constant 0 : index
    %c0_28 = arith.constant 0 : index
    %c0_29 = arith.constant 0 : index
    %47 = vector.load %arg8[%c0_27, %c0_28, %c0_29] : memref<1x8x128xf32, #tpu.memory_space<vmem>>, vector<1x8x128xf32>
    %48 = vector.shape_cast %47 : vector<1x8x128xf32> to vector<8x128xf32>
    %49 = vector.shape_cast %46 : vector<8x128xf32> to vector<1x8x128xf32>
    tpu.vector_store %arg8[%c0_27, %c0_28, %c0_29], %49 {strides = array<i32>} : memref<1x8x128xf32, #tpu.memory_space<vmem>>, vector<1x8x128xf32>,
    return
  }
  func.func @transform_0(%arg0: i32, %arg1: i32) -> (i32, i32, i32) {
    %c0_i32 = arith.constant 0 : i32
    %0 = arith.minsi %arg1, %c0_i32 : i32
    %c0_i32_0 = arith.constant 0 : i32
    %c0_i32_1 = arith.constant 0 : i32
    return %arg0, %c0_i32_0, %0 : i32, i32, i32
  }
  func.func @transform_1(%arg0: i32, %arg1: i32) -> (i32, i32, i32) {
    %c1_i32 = arith.constant 1 : i32
    %0 = arith.muli %arg1, %c1_i32 : i32
    %c1_i32_0 = arith.constant 1 : i32
    %1 = arith.subi %0, %c1_i32_0 : i32
    %c0_i32 = arith.constant 0 : i32
    %2 = arith.maxsi %1, %c0_i32 : i32
    %c0_i32_1 = arith.constant 0 : i32
    %c0_i32_2 = arith.constant 0 : i32
    return %arg0, %c0_i32_1, %2 : i32, i32, i32
  }
  func.func @transform_2(%arg0: i32, %arg1: i32) -> (i32, i32, i32) {
    %c1_i32 = arith.constant 1 : i32
    %0 = arith.addi %arg1, %c1_i32 : i32
    %c1_i32_0 = arith.constant 1 : i32
    %1 = arith.muli %0, %c1_i32_0 : i32
    %c0_i32 = arith.constant 0 : i32
    %2 = arith.minsi %1, %c0_i32 : i32
    %c0_i32_1 = arith.constant 0 : i32
    %c0_i32_2 = arith.constant 0 : i32
    return %arg0, %c0_i32_1, %2 : i32, i32, i32
  }
  func.func @transform_3(%arg0: i32, %arg1: i32) -> (i32, i32) {
    %c0_i32 = arith.constant 0 : i32
    %c0_i32_0 = arith.constant 0 : i32
    %c0_i32_1 = arith.constant 0 : i32
    return %c0_i32, %c0_i32_0 : i32, i32
  }
  func.func @transform_4(%arg0: i32, %arg1: i32) -> (i32, i32) {
    %c0_i32 = arith.constant 0 : i32
    %c0_i32_0 = arith.constant 0 : i32
    %c0_i32_1 = arith.constant 0 : i32
    return %c0_i32, %c0_i32_0 : i32, i32
  }
  func.func @transform_5(%arg0: i32, %arg1: i32) -> (i32, i32) {
    %c0_i32 = arith.constant 0 : i32
    %c0_i32_0 = arith.constant 0 : i32
    %c0_i32_1 = arith.constant 0 : i32
    return %c0_i32, %c0_i32_0 : i32, i32
  }
  func.func @transform_6(%arg0: i32, %arg1: i32) -> (i32, i32, i32) {
    %c0_i32 = arith.constant 0 : i32
    %c0_i32_0 = arith.constant 0 : i32
    return %arg0, %c0_i32, %arg1 : i32, i32, i32
  }
}

</mosaic_0001>

<llo_original>
// kernel: tpu_custom_call.1
$region0: #{tpu_custom_call.1}
  #allocation0 [shape = 'u32[]', space=smem, size = 0x4, offset = 0x4, fixed_abs, tag = 'smem constant byte address 0x4 - core index']
  #allocation1 [shape = 'u32[72,128]{1,0:T(1,128)}', space=vmem, size = 0x9000, scoped, tag = 'internal scratch']
  #allocation2 [shape = 'f32[4,384]{1,0:T(4,128)}', space=vmem, size = 0x1800, scoped, tag = 'scratch operand']
  %s0 = inlined_call_operand.vmem [shape: f32[2,4,16], index: 0, kind: input, shape index: {}]
  %s1 = inlined_call_operand.hbm [shape: f32[2,4,16], index: 1, kind: input, shape index: {}]
  %s2 = inlined_call_operand.hbm [shape: f32[2,4,16], index: 2, kind: input, shape index: {}]
  %s3 = inlined_call_operand.vmem [shape: f32[4,3], index: 3, kind: input, shape index: {}]
  %s4 = inlined_call_operand.vmem [shape: bf16[8,4], index: 4, kind: input, shape index: {}]
  %s5 = inlined_call_operand.vmem [shape: f32[8,1], index: 5, kind: input, shape index: {}]
  %s6 = inlined_call_operand.hbm [shape: f32[2,8,16], index: 6, kind: output, shape index: {}]
  %s7 = sld [smem:[#allocation0]]
  $region77: #{tpu_custom_call.1} parent=0
    _
  %s9 = ssub.s32 1, %s7
  %s10 = scalar_select 0, %s9, %s7
  $region1: #{tpu_custom_call.1} parent=0
    #allocation3 [shape = 'u8[4096]{0}', space=vmem, size = 0x1000, scoped, tag = 'input window, operand 1']
    #allocation4 [shape = 's32[2]{0}', space=sflag, size = 0x8, scoped, tag = 'scoped memory for tpu_custom_call.1']
    #allocation5 [shape = 's32[2]{0}', space=sflag, size = 0x8, scoped, tag = 'scoped memory for tpu_custom_call.1']
    #allocation6 [shape = 'u8[4096]{0}', space=vmem, size = 0x1000, scoped, tag = 'input window, operand 2']
    #allocation7 [shape = 's32[2]{0}', space=sflag, size = 0x8, scoped, tag = 'scoped memory for tpu_custom_call.1']
    #allocation8 [shape = 'u8[8192]{0}', space=vmem, size = 0x2000, scoped, tag = 'output window, operand 0']
    %11 = vsyncpa [#allocation4], 0
    %s12 = scalar_lea.sflag [#allocation4], 1
    %13 = vsyncpa %s12, 0
    %14 = vsyncpa [#allocation7], 0
    %s15 = scalar_lea.sflag [#allocation7], 1
    %16 = vsyncpa %s15, 0
    %17 = vsyncpa [#allocation5], 0
    %s18 = scalar_lea.sflag [#allocation5], 1
    %19 = vsyncpa %s18, 0
    loop: start=0, step=1, limit=4
    $region2: #{tpu_custom_call.1} parent=1 // loop_pre_header
      _
    $region3: #{tpu_custom_call.1} parent=1 // loop_header
      %s21 = sphi 0, %s25
      %p22 = scmp.ge.s32.totalorder %s21, 4
      %s28 = sphi 0, %s40
      %s29 = sphi 0, %s36
      %s30 = sphi 0, %s28
      %s31 = sphi 0, %s29
      %s32 = sphi 0, %s30
      %s33 = sphi 0, %s31
      %s49 = sphi 0, %s51
      %s52 = sphi 0, %s49
      %s53 = sphi 0, %s52
      %s69 = sphi 0, %s53
      %s83 = sphi 0, %s85
      %s86 = sphi 0, %s83
      %s87 = sphi 0, %s86
      %s103 = sphi 0, %s87
      %s117 = sphi 0, %s119
      %s120 = sphi 0, %s117
      %s121 = sphi 0, %s120
      %s137 = sphi 0, %s121
      %s141 = sphi 0, %s141
      %s143 = sphi 0, %s141
      %s144 = sphi 0, %s143
      %s158 = sphi 0, %s144
      %s162 = sphi 0, %s162
      %s164 = sphi 0, %s162
      %s165 = sphi 0, %s164
      %s179 = sphi 0, %s165
      %s183 = sphi 0, %s183
      %s185 = sphi 0, %s183
      %s186 = sphi 0, %s185
      %s200 = sphi 0, %s186
      %s208 = sphi 0, %s210
      %s211 = sphi 0, %s208
      %s212 = sphi 0, %s211
      %s228 = sphi 0, %s212
    $region4: #{tpu_custom_call.1} parent=1 // loop_header_branch
      %24 = sbr.rel (%p22) target = $region8
    $region5: #{tpu_custom_call.1} parent=1 // loop_body
      %s26 = ssub.s32 %s21, 1
      %s27 = ssub.s32 %s21, 2
      %s34 = sadd.s32 1, %s29
      %p35 = scmp.ge.s32.totalorder %s34, 1
      %s36 = scalar_select %p35, 0, %s34
      %s37 = sadd.s32 1, %s28
      %s38 = scalar_select %p35, %s37, %s28
      %p39 = scmp.ge.s32.totalorder %s38, 2
      %s40 = scalar_select %p39, 0, %s38
      %p41 = scmp.lt.s32.totalorder %s29, 0
      %s42 = scalar_select %p41, %s29, 0
      %p43 = scmp.lt.s32.totalorder %s36, 0
      %s44 = scalar_select %p43, %s36, 0
      %s45 = ssub.s32 %s28, %s40
      %s46 = ssub.s32 %s42, %s44
      %s47 = sor.u32 %s45, %s46
      %p48 = scmp.eq.s32.totalorder %s47, 0
      %s50 = sadd.s32 %s49, 1
      %s51 = scalar_select %p48, %s49, %s50
      %p54 = pneg %p48
      %p55 = scmp.eq.s32.totalorder %s21, 1
      %p56 = por %p54, %p55
      %p57 = scmp.ne.s32.totalorder %s49, %s52
      %p58 = scmp.eq.s32.totalorder %s21, 0
      %p59 = por %p57, %p58
      %p60 = scmp.ne.s32.totalorder %s49, %s52
      %p61 = scmp.eq.s32.totalorder %s26, 1
      %p62 = por %p60, %p61
      %p63 = scmp.ne.s32.totalorder %s52, %s53
      %p64 = scmp.eq.s32.totalorder %s26, 0
      %p65 = por %p63, %p64
      %p66 = scmp.ne.s32.totalorder %s52, %s53
      %p67 = scmp.eq.s32.totalorder %s27, 1
      %p68 = por %p66, %p67
      %p70 = scmp.ne.s32.totalorder %s53, %s69
      %p71 = scmp.eq.s32.totalorder %s27, 0
      %p72 = por %p70, %p71
      %s73 = ssub.s32 %s29, 1
      %p74 = scmp.gt.s32.totalorder %s73, 0
      %s75 = scalar_select %p74, %s73, 0
      %s76 = ssub.s32 %s36, 1
      %p77 = scmp.gt.s32.totalorder %s76, 0
      %s78 = scalar_select %p77, %s76, 0
      %s79 = ssub.s32 %s28, %s40
      %s80 = ssub.s32 %s75, %s78
      %s81 = sor.u32 %s79, %s80
      %p82 = scmp.eq.s32.totalorder %s81, 0
      %s84 = sadd.s32 %s83, 1
      %s85 = scalar_select %p82, %s83, %s84
      %p88 = pneg %p82
      %p89 = scmp.eq.s32.totalorder %s21, 1
      %p90 = por %p88, %p89
      %p91 = scmp.ne.s32.totalorder %s83, %s86
      %p92 = scmp.eq.s32.totalorder %s21, 0
      %p93 = por %p91, %p92
      %p94 = scmp.ne.s32.totalorder %s83, %s86
      %p95 = scmp.eq.s32.totalorder %s26, 1
      %p96 = por %p94, %p95
      %p97 = scmp.ne.s32.totalorder %s86, %s87
      %p98 = scmp.eq.s32.totalorder %s26, 0
      %p99 = por %p97, %p98
      %p100 = scmp.ne.s32.totalorder %s86, %s87
      %p101 = scmp.eq.s32.totalorder %s27, 1
      %p102 = por %p100, %p101
      %p104 = scmp.ne.s32.totalorder %s87, %s103
      %p105 = scmp.eq.s32.totalorder %s27, 0
      %p106 = por %p104, %p105
      %s107 = sadd.s32 %s29, 1
      %p108 = scmp.lt.s32.totalorder %s107, 0
      %s109 = scalar_select %p108, %s107, 0
      %s110 = sadd.s32 %s36, 1
      %p111 = scmp.lt.s32.totalorder %s110, 0
      %s112 = scalar_select %p111, %s110, 0
      %s113 = ssub.s32 %s28, %s40
      %s114 = ssub.s32 %s109, %s112
      %s115 = sor.u32 %s113, %s114
      %p116 = scmp.eq.s32.totalorder %s115, 0
      %s118 = sadd.s32 %s117, 1
      %s119 = scalar_select %p116, %s117, %s118
      %p122 = pneg %p116
      %p123 = scmp.eq.s32.totalorder %s21, 1
      %p124 = por %p122, %p123
      %p125 = scmp.ne.s32.totalorder %s117, %s120
      %p126 = scmp.eq.s32.totalorder %s21, 0
      %p127 = por %p125, %p126
      %p128 = scmp.ne.s32.totalorder %s117, %s120
      %p129 = scmp.eq.s32.totalorder %s26, 1
      %p130 = por %p128, %p129
      %p131 = scmp.ne.s32.totalorder %s120, %s121
      %p132 = scmp.eq.s32.totalorder %s26, 0
      %p133 = por %p131, %p132
      %p134 = scmp.ne.s32.totalorder %s120, %s121
      %p135 = scmp.eq.s32.totalorder %s27, 1
      %p136 = por %p134, %p135
      %p138 = scmp.ne.s32.totalorder %s121, %s137
      %p139 = scmp.eq.s32.totalorder %s27, 0
      %p140 = por %p138, %p139
      %s142 = sadd.s32 %s141, 1
      %p145 = scmp.eq.s32.totalorder %s21, 1
      %p146 = scmp.ne.s32.totalorder %s141, %s143
      %p147 = scmp.eq.s32.totalorder %s21, 0
      %p148 = por %p146, %p147
      %p149 = scmp.ne.s32.totalorder %s141, %s143
      %p150 = scmp.eq.s32.totalorder %s26, 1
      %p151 = por %p149, %p150
      %p152 = scmp.ne.s32.totalorder %s143, %s144
      %p153 = scmp.eq.s32.totalorder %s26, 0
      %p154 = por %p152, %p153
      %p155 = scmp.ne.s32.totalorder %s143, %s144
      %p156 = scmp.eq.s32.totalorder %s27, 1
      %p157 = por %p155, %p156
      %p159 = scmp.ne.s32.totalorder %s144, %s158
      %p160 = scmp.eq.s32.totalorder %s27, 0
      %p161 = por %p159, %p160
      %s163 = sadd.s32 %s162, 1
      %p166 = scmp.eq.s32.totalorder %s21, 1
      %p167 = scmp.ne.s32.totalorder %s162, %s164
      %p168 = scmp.eq.s32.totalorder %s21, 0
      %p169 = por %p167, %p168
      %p170 = scmp.ne.s32.totalorder %s162, %s164
      %p171 = scmp.eq.s32.totalorder %s26, 1
      %p172 = por %p170, %p171
      %p173 = scmp.ne.s32.totalorder %s164, %s165
      %p174 = scmp.eq.s32.totalorder %s26, 0
      %p175 = por %p173, %p174
      %p176 = scmp.ne.s32.totalorder %s164, %s165
      %p177 = scmp.eq.s32.totalorder %s27, 1
      %p178 = por %p176, %p177
      %p180 = scmp.ne.s32.totalorder %s165, %s179
      %p181 = scmp.eq.s32.totalorder %s27, 0
      %p182 = por %p180, %p181
      %s184 = sadd.s32 %s183, 1
      %p187 = scmp.eq.s32.totalorder %s21, 1
      %p188 = scmp.ne.s32.totalorder %s183, %s185
      %p189 = scmp.eq.s32.totalorder %s21, 0
      %p190 = por %p188, %p189
      %p191 = scmp.ne.s32.totalorder %s183, %s185
      %p192 = scmp.eq.s32.totalorder %s26, 1
      %p193 = por %p191, %p192
      %p194 = scmp.ne.s32.totalorder %s185, %s186
      %p195 = scmp.eq.s32.totalorder %s26, 0
      %p196 = por %p194, %p195
      %p197 = scmp.ne.s32.totalorder %s185, %s186
      %p198 = scmp.eq.s32.totalorder %s27, 1
      %p199 = por %p197, %p198
      %p201 = scmp.ne.s32.totalorder %s186, %s200
      %p202 = scmp.eq.s32.totalorder %s27, 0
      %p203 = por %p201, %p202
      %s204 = ssub.s32 %s28, %s40
      %s205 = ssub.s32 %s29, %s36
      %s206 = sor.u32 %s204, %s205
      %p207 = scmp.eq.s32.totalorder %s206, 0
      %s209 = sadd.s32 %s208, 1
      %s210 = scalar_select %p207, %s208, %s209
      %p213 = pneg %p207
      %p214 = scmp.eq.s32.totalorder %s21, 1
      %p215 = por %p213, %p214
      %p216 = scmp.ne.s32.totalorder %s208, %s211
      %p217 = scmp.eq.s32.totalorder %s21, 0
      %p218 = por %p216, %p217
      %p219 = scmp.ne.s32.totalorder %s208, %s211
      %p220 = scmp.eq.s32.totalorder %s26, 1
      %p221 = por %p219, %p220
      %p222 = scmp.ne.s32.totalorder %s211, %s212
      %p223 = scmp.eq.s32.totalorder %s26, 0
      %p224 = por %p222, %p223
      %p225 = scmp.ne.s32.totalorder %s211, %s212
      %p226 = scmp.eq.s32.totalorder %s27, 1
      %p227 = por %p225, %p226
      %p229 = scmp.ne.s32.totalorder %s212, %s228
      %p230 = scmp.eq.s32.totalorder %s27, 0
      %p231 = por %p229, %p230
      %p232 = scmp.le.s32.totalorder 1, %s21
      %p233 = scmp.lt.s32.totalorder %s21, 3
      %p234 = pnand %p232, %p233
      %p235 = pneg %p234
      // Predicated region
      $region9: #{tpu_custom_call.1} parent=5 // pred_check
        _
      $region10: #{tpu_custom_call.1} parent=5 // pred_check_branch
        %237 = sbr.rel (%p234) target = $region12
      $region11: #{tpu_custom_call.1} parent=5 // pred_region
        %s238 = ssub.s32 %s21, 1
        // Predicated region
        $region13: #{tpu_custom_call.1} parent=11 // pred_check
          %p239 = pneg %p154
        $region14: #{tpu_custom_call.1} parent=11 // pred_check_branch
          %241 = sbr.rel (%p239) target = $region16
        $region15: #{tpu_custom_call.1} parent=11 // pred_region
          _
        $region16: #{tpu_custom_call.1} parent=11 // pred_fallthru
          _
        // Predicated region
        $region17: #{tpu_custom_call.1} parent=11 // pred_check
          %p242 = pneg %p175
        $region18: #{tpu_custom_call.1} parent=11 // pred_check_branch
          %244 = sbr.rel (%p242) target = $region20
        $region19: #{tpu_custom_call.1} parent=11 // pred_region
          _
        $region20: #{tpu_custom_call.1} parent=11 // pred_fallthru
          _
        // Predicated region
        $region21: #{tpu_custom_call.1} parent=11 // pred_check
          %p245 = pneg %p196
        $region22: #{tpu_custom_call.1} parent=11 // pred_check_branch
          %247 = sbr.rel (%p245) target = $region24
        $region23: #{tpu_custom_call.1} parent=11 // pred_region
          _
        $region24: #{tpu_custom_call.1} parent=11 // pred_fallthru
          _
      $region12: #{tpu_custom_call.1} parent=5 // pred_fallthru
        _
      %p248 = scmp.lt.s32.totalorder %s21, 2
      // Predicated region
      $region25: #{tpu_custom_call.1} parent=5 // pred_check
        %p249 = pneg %p248
      $region26: #{tpu_custom_call.1} parent=5 // pred_check_branch
        %251 = sbr.rel (%p249) target = $region28
      $region27: #{tpu_custom_call.1} parent=5 // pred_region
        // Predicated region
        $region29: #{tpu_custom_call.1} parent=27 // pred_check
          %p252 = pneg %p59
        $region30: #{tpu_custom_call.1} parent=27 // pred_check_branch
          %254 = sbr.rel (%p252) target = $region32
        $region31: #{tpu_custom_call.1} parent=27 // pred_region
          %p255 = scmp.lt.s32.totalorder %s29, 0
          %s256 = scalar_select %p255, %s29, 0
          %p257 = scmp.lt.s32.totalorder %s28, 1
          %s258 = scalar_select %p257, %s28, 1
          %p259 = scmp.lt.s32.totalorder %s256, 0
          %s260 = scalar_select %p259, %s256, 0
          %s261 = sadd.s32 %s260, %s258
          %s262 = smul.addr %s261, 4
          %s263 = scalar_lea.vmem %s0, %s262
          %p264 = scmp.lt.s32.totalorder %s29, 0
          %s265 = scalar_select %p264, %s29, 0
        $region32: #{tpu_custom_call.1} parent=27 // pred_fallthru
          _
        // Predicated region
        $region33: #{tpu_custom_call.1} parent=27 // pred_check
          %p266 = pneg %p93
        $region34: #{tpu_custom_call.1} parent=27 // pred_check_branch
          %268 = sbr.rel (%p266) target = $region36
        $region35: #{tpu_custom_call.1} parent=27 // pred_region
          %s269 = sand.u32 %s83, 1
          %s270 = scalar_lea.sflag [#allocation4], %s269
          %s271 = sand.u32 %s83, 1
          %s272 = smul.addr %s271, 4
          %s273 = scalar_lea.vmem [#allocation3], %s272
          %s274 = ssub.s32 %s29, 1
          %p275 = scmp.gt.s32.totalorder %s274, 0
          %s276 = scalar_select %p275, %s274, 0
          %278 = vsyncadd %s270, 0
          %s279 = sadd.s32 %s276, %s28
          %s280 = smul.addr %s279, 4
          %s281 = scalar_lea.hbm %s1, %s280
          %s283 = sshll.u32 %s281, 4
          %s284 = int_to_ptr.hbm [resolvable:$true] %s283
          %s285 = sshll.u32 %s273, 4
          %s286 = int_to_ptr.vmem [resolvable:$true] %s285
          %288 = dma.hbm_to_vmem [thread:$0]  %s284, 64, %s286, %s270
        $region36: #{tpu_custom_call.1} parent=27 // pred_fallthru
          _
        // Predicated region
        $region37: #{tpu_custom_call.1} parent=27 // pred_check
          %p289 = pneg %p127
        $region38: #{tpu_custom_call.1} parent=27 // pred_check_branch
          %291 = sbr.rel (%p289) target = $region40
        $region39: #{tpu_custom_call.1} parent=27 // pred_region
          %s292 = sand.u32 %s117, 1
          %s293 = scalar_lea.sflag [#allocation7], %s292
          %s294 = sand.u32 %s117, 1
          %s295 = smul.addr %s294, 4
          %s296 = scalar_lea.vmem [#allocation6], %s295
          %s297 = sadd.s32 %s29, 1
          %p298 = scmp.lt.s32.totalorder %s297, 0
          %s299 = scalar_select %p298, %s297, 0
          %301 = vsyncadd %s293, 0
          %s302 = sadd.s32 %s299, %s28
          %s303 = smul.addr %s302, 4
          %s304 = scalar_lea.hbm %s2, %s303
          %s306 = sshll.u32 %s304, 4
          %s307 = int_to_ptr.hbm [resolvable:$true] %s306
          %s308 = sshll.u32 %s296, 4
          %s309 = int_to_ptr.vmem [resolvable:$true] %s308
          %311 = dma.hbm_to_vmem [thread:$0]  %s307, 64, %s309, %s293
        $region40: #{tpu_custom_call.1} parent=27 // pred_fallthru
          _
      $region28: #{tpu_custom_call.1} parent=5 // pred_fallthru
        _
      %p312 = scmp.le.s32.totalorder 1, %s21
      %p313 = scmp.lt.s32.totalorder %s21, 3
      %p314 = pnand %p312, %p313
      %p315 = pneg %p314
      // Predicated region
      $region41: #{tpu_custom_call.1} parent=5 // pred_check
        _
      $region42: #{tpu_custom_call.1} parent=5 // pred_check_branch
        %317 = sbr.rel (%p314) target = $region44
      $region43: #{tpu_custom_call.1} parent=5 // pred_region
        %s318 = ssub.s32 %s21, 1
        %s319 = sand.u32 %s86, 1
        %s320 = scalar_lea.sflag [#allocation4], %s319
        %s321 = sand.u32 %s86, 1
        %s322 = smul.addr %s321, 4
        %s323 = scalar_lea.vmem [#allocation3], %s322
        // Predicated region
        $region45: #{tpu_custom_call.1} parent=43 // pred_check
          %p324 = pneg %p99
        $region46: #{tpu_custom_call.1} parent=43 // pred_check_branch
          %326 = sbr.rel (%p324) target = $region48
        $region47: #{tpu_custom_call.1} parent=43 // pred_region
          %328 = dma.done %s320, 64
        $region48: #{tpu_custom_call.1} parent=43 // pred_fallthru
          _
        %s329 = sand.u32 %s120, 1
        %s330 = scalar_lea.sflag [#allocation7], %s329
        %s331 = sand.u32 %s120, 1
        %s332 = smul.addr %s331, 4
        %s333 = scalar_lea.vmem [#allocation6], %s332
        // Predicated region
        $region49: #{tpu_custom_call.1} parent=43 // pred_check
          %p334 = pneg %p133
        $region50: #{tpu_custom_call.1} parent=43 // pred_check_branch
          %336 = sbr.rel (%p334) target = $region52
        $region51: #{tpu_custom_call.1} parent=43 // pred_region
          %338 = dma.done %s330, 64
        $region52: #{tpu_custom_call.1} parent=43 // pred_fallthru
          _
        %p339 = scmp.lt.s32.totalorder %s31, 0
        %s340 = scalar_select %p339, %s31, 0
        %p341 = scmp.lt.s32.totalorder %s30, 1
        %s342 = scalar_select %p341, %s30, 1
        %p343 = scmp.lt.s32.totalorder %s340, 0
        %s344 = scalar_select %p343, %s340, 0
        %s345 = sadd.s32 %s344, %s342
        %s346 = smul.addr %s345, 4
        %s347 = scalar_lea.vmem %s0, %s346
        %p348 = pneg %p65
        %p349 = pneg %p62
        %s350 = sand.u32 %s86, 1
        %s351 = scalar_lea.sflag [#allocation4], %s350
        %s352 = sand.u32 %s86, 1
        %s353 = smul.addr %s352, 4
        %s354 = scalar_lea.vmem [#allocation3], %s353
        %p355 = pneg %p99
        %p356 = pneg %p96
        %s357 = sand.u32 %s120, 1
        %s358 = scalar_lea.sflag [#allocation7], %s357
        %s359 = sand.u32 %s120, 1
        %s360 = smul.addr %s359, 4
        %s361 = scalar_lea.vmem [#allocation6], %s360
        %p362 = pneg %p133
        %p363 = pneg %p130
        %p364 = pneg %p154
        %p365 = pneg %p151
        %p366 = pneg %p175
        %p367 = pneg %p172
        %p368 = pneg %p196
        %p369 = pneg %p193
        %p370 = pneg %p224
        %p371 = pneg %p221
        %s372 = sand.u32 %s211, 1
        %s373 = scalar_lea.sflag [#allocation5], %s372
        %s374 = sand.u32 %s211, 1
        %s375 = smul.addr %s374, 8
        %s376 = scalar_lea.vmem [#allocation8], %s375
        %p377 = scmp.lt.s32.totalorder %s31, 0
        %s378 = scalar_select %p377, %s31, 0
        %p379 = scmp.lt.s32.totalorder %s30, 1
        %s380 = scalar_select %p379, %s30, 1
        %p381 = scmp.lt.s32.totalorder %s378, 0
        %s382 = scalar_select %p381, %s378, 0
        %s383 = sadd.s32 %s382, %s380
        %s384 = smul.addr %s383, 4
        %s385 = scalar_lea.vmem %s0, %s384
        %p386 = scmp.lt.s32.totalorder %s31, 0
        %s387 = scalar_select %p386, %s31, 0
        %s388 = ssub.s32 %s31, 1
        %p389 = scmp.gt.s32.totalorder %s388, 0
        %s390 = scalar_select %p389, %s388, 0
        %s391 = sadd.s32 %s31, 1
        %p392 = scmp.lt.s32.totalorder %s391, 0
        %s393 = scalar_select %p392, %s391, 0
        %v395 = vld [vmem:[%s323] sm:$0xf]
        %396 = vst [vmem:[#allocation2] sm:$0xf] %v395
        %v397 = vld [vmem:[%s385] sm:$0xf]
        %398 = vst [vmem:[#allocation2 + $0x4] sm:$0xf] %v397
        %v399 = vld [vmem:[%s333] sm:$0xf]
        %400 = vst [vmem:[#allocation2 + $0x8] sm:$0xf] %v399
        %p401 = scmp.eq.s32.totalorder %s31, 0
        // Predicated region
        $region53: #{tpu_custom_call.1} parent=43 // pred_check
          %p402 = pneg %p401
        $region54: #{tpu_custom_call.1} parent=43 // pred_check_branch
          %404 = sbr.rel (%p402) target = $region56
        $region55: #{tpu_custom_call.1} parent=43 // pred_region
          %405 = vst [vmem:[#allocation2] sm:$0xf] 0.0
        $region56: #{tpu_custom_call.1} parent=43 // pred_fallthru
          _
        %s406 = sadd.s32 %s31, 1
        %s407 = smul.u32 %s406, 128
        %s408 = sadd.s32 %s407, 128
        %p409 = scmp.gt.s32.totalorder %s408, 16
        // Predicated region
        $region57: #{tpu_custom_call.1} parent=43 // pred_check
          %p410 = pneg %p409
        $region58: #{tpu_custom_call.1} parent=43 // pred_check_branch
          %412 = sbr.rel (%p410) target = $region60
        $region59: #{tpu_custom_call.1} parent=43 // pred_region
          %v413 = vlaneseq
          %v414 = vand.u32 %v413, 127
          %s415 = ssub.s32 16, %s407
          %v416 = vstv %s415
          %vm417 = vcmp.lt.s32.totalorder %v414, %v416
          %v418 = vld [vmem:[%s333] sm:$0xf]
          %v419 = vsel %vm417, %v418, 0.0
          %420 = vst [vmem:[#allocation2 + $0x8] sm:$0xf] %v419
        $region60: #{tpu_custom_call.1} parent=43 // pred_fallthru
          _
        %p421 = scmp.gt.s32.totalorder %s407, 16
        // Predicated region
        $region61: #{tpu_custom_call.1} parent=43 // pred_check
          %p422 = pneg %p421
        $region62: #{tpu_custom_call.1} parent=43 // pred_check_branch
          %424 = sbr.rel (%p422) target = $region64
        $region63: #{tpu_custom_call.1} parent=43 // pred_region
          %v425 = vlaneseq
          %v426 = vand.u32 %v425, 127
          %s427 = smul.u32 %s31, 128
          %s428 = ssub.s32 16, %s427
          %v429 = vstv %s428
          %vm430 = vcmp.lt.s32.totalorder %v426, %v429
          %v431 = vld [vmem:[%s385] sm:$0xf]
          %v432 = vsel %vm430, %v431, 0.0
          %433 = vst [vmem:[#allocation2 + $0x4] sm:$0xf] %v432
        $region64: #{tpu_custom_call.1} parent=43 // pred_fallthru
          _
        %v434 = vld [vmem:[#allocation2] sm:$0xff]
        %v435 = vld [vmem:[#allocation2 + $0x8] sm:$0xf]
        %v436 = vld [vmem:[%s3] sm:$0xf]
        %439 = vst [vmem:[#allocation1] ss:$2 sm:$0xff] %v434
        %s440 = scalar_lea.vmem [#allocation1], 16
        %441 = vst [vmem:[%s440] ss:$2 sm:$0xff] %v435
        %v442 = vld.sshfl [vmem:[#allocation1] sm:$0xff pattern:$0x75316420]
        %v443 = vld.sshfl [vmem:[#allocation1 + $0x8] sm:$0xff pattern:$0x75316420]
        %446 = vrot.lane.b32.xlu0 %v442, 1
        %v447 = vpop.permute.xlu0 %446
        %448 = vrot.lane.b32.xlu0 %v443, 1
        %v449 = vpop.permute.xlu0 %448
        %v450 = vlaneseq
        %v451 = vand.u32 %v450, 127
        %vm452 = vcmp.lt.s32.totalorder %v451, 1
        %v453 = vsel %vm452, %v447, %v449
        %455 = vset.pattern.permute.xlu0 0
        %456 = vperm.xlu0 %455, %v436
        %v457 = vpop.permute.xlu0 %456
        %v459 = vmul.f32 %v453, %v457
        %460 = vset.pattern.permute.xlu0 1
        %461 = vperm.xlu0 %460, %v436
        %v462 = vpop.permute.xlu0 %461
        %v464 = vrot.slane %v434, 4
        %v466 = vmul.f32 %v464, %v462
        %v467 = vadd.f32 %v459, %v466
        %468 = vst [vmem:[#allocation1] ss:$2 sm:$0xff] %v434
        %s469 = scalar_lea.vmem [#allocation1], 16
        %470 = vst [vmem:[%s469] ss:$2 sm:$0xff] %v435
        %v471 = vld.sshfl [vmem:[#allocation1 + $0x8] sm:$0xff pattern:$0x75316420]
        %v472 = vld.sshfl [vmem:[#allocation1 + $0x10] sm:$0xff pattern:$0x75316420]
        %475 = vrot.lane.b32.xlu0 %v471, 127
        %v476 = vpop.permute.xlu0 %475
        %477 = vrot.lane.b32.xlu0 %v472, 127
        %v478 = vpop.permute.xlu0 %477
        %vm479 = vcmp.lt.s32.totalorder %v451, 127
        %v480 = vsel %vm479, %v476, %v478
        %481 = vset.pattern.permute.xlu0 2
        %482 = vperm.xlu0 %481, %v436
        %v483 = vpop.permute.xlu0 %482
        %v485 = vmul.f32 %v480, %v483
        %v486 = vadd.f32 %v467, %v485
        %v487 = vld [vmem:[%s4] sm:$0xf]
        %v488 = vpack.c.bf16 %v486, %v486
        %v489 = vld [vmem:[%s5] sm:$0xff]
        %491 = vset.pattern.permute.xlu0 0
        %492 = vperm.xlu0 %491, %v489
        %v493 = vpop.permute.xlu0 %492
        %vm495 = vcmask 31744
        %v497 = vsel %vm495, %v487, 0
        %vm499 = vcmask 1041408
        %v501 = vsel %vm499, %v488, 0
        %503 = vmatpush.bf16.msra.mxu0 0
        %504 = vmatpush.bf16.msra.mxu0 0
        %505 = vmatpush.bf16.msra.mxu0 0
        %506 = vmatpush.bf16.msra.mxu0 0
        %507 = vmatpush.bf16.msra.mxu0 0
        %508 = vmatpush.bf16.msra.mxu0 0
        %509 = vmatpush.bf16.msra.mxu0 0
        %510 = vmatpush.bf16.msra.mxu0 %v501
        %511 = vmatmul.bf16.gmra.mxu0 %v497
        %v512 = vpop.f32.mrf.mxu0
        %v513 = vadd.f32 %v493, %v512
        %v514 = vpop.f32.mrf.mxu0
        %515 = vdwg.mxu0
        %516 = vst [vmem:[%s376] sm:$0xff] %v513
        %s517 = sand.u32 %s211, 1
        %s518 = scalar_lea.sflag [#allocation5], %s517
        %s519 = sand.u32 %s211, 1
        %s520 = smul.addr %s519, 8
        %s521 = scalar_lea.vmem [#allocation8], %s520
        // Predicated region
        $region65: #{tpu_custom_call.1} parent=43 // pred_check
          %p522 = pneg %p221
        $region66: #{tpu_custom_call.1} parent=43 // pred_check_branch
          %524 = sbr.rel (%p522) target = $region68
        $region67: #{tpu_custom_call.1} parent=43 // pred_region
          %526 = vsyncadd %s518, 0
          %s527 = sadd.s32 %s31, %s30
          %s528 = smul.addr %s527, 8
          %s529 = scalar_lea.hbm %s6, %s528
          %s531 = sshll.u32 %s521, 4
          %s532 = int_to_ptr.vmem [resolvable:$true] %s531
          %s533 = sshll.u32 %s529, 4
          %s534 = int_to_ptr.hbm [resolvable:$true] %s533
          %536 = dma.vmem_to_hbm [thread:$0]  %s532, 128, %s534, %s518
        $region68: #{tpu_custom_call.1} parent=43 // pred_fallthru
          _
      $region44: #{tpu_custom_call.1} parent=5 // pred_fallthru
        _
      %p537 = scmp.le.s32.totalorder 2, %s21
      // Predicated region
      $region69: #{tpu_custom_call.1} parent=5 // pred_check
        %p538 = pneg %p537
      $region70: #{tpu_custom_call.1} parent=5 // pred_check_branch
        %540 = sbr.rel (%p538) target = $region72
      $region71: #{tpu_custom_call.1} parent=5 // pred_region
        %s541 = ssub.s32 %s21, 2
        // Predicated region
        $region73: #{tpu_custom_call.1} parent=71 // pred_check
          %p542 = pneg %p227
        $region74: #{tpu_custom_call.1} parent=71 // pred_check_branch
          %544 = sbr.rel (%p542) target = $region76
        $region75: #{tpu_custom_call.1} parent=71 // pred_region
          %s545 = sand.u32 %s212, 1
          %s546 = scalar_lea.sflag [#allocation5], %s545
          %s547 = sand.u32 %s212, 1
          %s548 = smul.addr %s547, 8
          %s549 = scalar_lea.vmem [#allocation8], %s548
          %551 = dma.done %s546, 128
        $region76: #{tpu_custom_call.1} parent=71 // pred_fallthru
          _
      $region72: #{tpu_custom_call.1} parent=5 // pred_fallthru
        _
    $region6: #{tpu_custom_call.1} parent=1 // loop_footer
      %s25 = sadd.s32 1, %s21
    $region7: #{tpu_custom_call.1} parent=1 // loop_footer_branch
      %20 = sbr.rel target = $region3
    $region8: #{tpu_custom_call.1} parent=1 // loop_exit
      _
    %552 = vsyncpa [#allocation4], 1
    %s553 = scalar_lea.sflag [#allocation4], 1
    %554 = vsyncpa %s553, 1
    %555 = vsyncpa [#allocation7], 1
    %s556 = scalar_lea.sflag [#allocation7], 1
    %557 = vsyncpa %s556, 1
    %558 = vsyncpa [#allocation5], 1
    %s559 = scalar_lea.sflag [#allocation5], 1
    %560 = vsyncpa %s559, 1

</llo_original>
